<compile_context>
chip_gen: v7x
topology: tpu7x:2x2x1
jax: 0.10.0
libtpu: 0.0.40
codegen_flags: <defaults>
</compile_context>

<pallas_src>
import functools
import numpy as np
import jax
import jax.numpy as jnp
from jax.experimental import pallas as pl
from jax.experimental.pallas import tpu as pltpu

# ---- module hyperparameters (small, deterministic) ---------------------------
B = 8
CONTEXT_LENGTH = 16          # context_length
PREDICTION_LENGTH = 8        # prediction_length (h)
OUTPUT_SIZE = [1]            # output_size (list of per-target sizes)
COVARIATE_SIZE = 0
N_BLOCKS = [2]
N_LAYERS = [2]
HIDDEN_SIZE = [[32, 32]]
POOLING_SIZES = [2]
NAIVE_LEVEL = True

N_BLOCKS_TOTAL = sum(N_BLOCKS)
POOL = POOLING_SIZES[0]
N_THETA = CONTEXT_LENGTH + PREDICTION_LENGTH   # identity stack


def _round_up(x, m):
    return ((x + m - 1) // m) * m


def _cdiv(a, b):
    return -(-a // b)


# ---- Pallas kernel: full fused forward (all blocks + forecast + naive level) -
def _nbeats_fused_kernel(y_ref, w1_ref, b1_ref, w2_ref, b2_ref, w3_ref, b3_ref,
                         out_ref, *, context_length, prediction_length,
                         n_blocks, naive_level):
    L = context_length
    H = prediction_length
    LH = L + H
    fore_start = n_blocks * LH
    out_w = out_ref.shape[1]

    y = y_ref[...]                                       # [bt, L] f32, lane-dense

    # MaxPool1d(kernel=stride=2, ceil_mode): pairwise max of adjacent lanes,
    # built with one explicit lane shift (roll-by-1 via concat, direction is
    # unambiguous).  pm[:, 2k] == max(y[:, 2k], y[:, 2k+1]); odd columns hit
    # the zero rows of the lane-expanded W1, so no compaction is needed and
    # the first matmul keeps an 8/16-aligned K.
    y_next = jnp.concatenate([y[:, 1:], y[:, :1]], axis=1)
    pm = jnp.maximum(y, y_next)                          # [bt, L]

    # All blocks' MLPs in one bf16 matmul chain (single-pass MXU, f32 accum);
    # bias adds and ReLU stay in f32 (no bf16 VALU on v5e).
    h = jnp.dot(pm.astype(jnp.bfloat16), w1_ref[...],
                preferred_element_type=jnp.float32) + b1_ref[...]
    h = jnp.maximum(h, 0.0)
    h = jnp.dot(h.astype(jnp.bfloat16), w2_ref[...],
                preferred_element_type=jnp.float32) + b2_ref[...]
    h = jnp.maximum(h, 0.0)
    # W3/b3 are augmented host-side with H columns holding the summed per-block
    # forecast weights plus zero-pad columns up to the lane-aligned width, so
    # this single matmul directly emits
    #   [ theta_block0 | theta_block1 | accumulated forecast | 0-pad ].
    out = jnp.dot(h.astype(jnp.bfloat16), w3_ref[...],
                  preferred_element_type=jnp.float32) + b3_ref[...]

    if naive_level:
        # Broadcast the last observed level onto the forecast lanes only — one
        # masked add, so the kernel keeps a single full-width block store.
        lane = jax.lax.broadcasted_iota(jnp.int32, (1, out_w), 1)
        fmask = jnp.logical_and(lane >= fore_start, lane < fore_start + H)
        out = out + jnp.where(fmask, y[:, L - 1:L], 0.0)

    out_ref[...] = out


def _batch_tiling(batch, max_tile=1024, align=8):
    """Choose (padded_batch, tile).

    * Ragged batches are padded up to the tile multiple instead of shrinking to
      8-row tiles (keeps MXU M-fill and per-step overhead sane).
    * Tiles are capped at `max_tile` rows (512-1024-row tiles hit ~85% of the
      HBM roofline vs ~63% at 256; per-grid-step overhead ~0.35 us).
    * >= 2 grid steps whenever the batch allows, so the "parallel" grid axis
      shards across both v7x TensorCores (no effect on single-TC v5e/v6e).
    """
    n_steps = max(2, _cdiv(batch, max_tile))
    bt = max(align, _round_up(_cdiv(batch, n_steps), align))
    padded = _round_up(batch, bt)
    return padded, bt


def nbeats_fused_apply(y_flat, fused_params, *, context_length, prediction_length,
                       n_blocks, naive_level):
    Bb, L = y_flat.shape
    assert L == context_length
    H = prediction_length
    LH = L + H
    out_w_logical = n_blocks * LH + H
    w1, b1, w2, b2, w3, b3 = fused_params
    out_w = w3.shape[1]                       # lane-aligned output width (>= logical)

    padded_b, bt = _batch_tiling(Bb)
    if padded_b != Bb:
        y_flat = jnp.pad(y_flat, ((0, padded_b - Bb), (0, 0)))

    kernel = functools.partial(
        _nbeats_fused_kernel, context_length=context_length,
        prediction_length=prediction_length, n_blocks=n_blocks,
        naive_level=naive_level)

    weight_specs = [pl.BlockSpec(p.shape, lambda i: (0, 0))
                    for p in (w1, b1, w2, b2, w3, b3)]

    out = pl.pallas_call(
        kernel,
        out_shape=jax.ShapeDtypeStruct((padded_b, out_w), jnp.float32),
        grid=(padded_b // bt,),
        in_specs=[pl.BlockSpec((bt, L), lambda i: (i, 0))] + weight_specs,
        out_specs=pl.BlockSpec((bt, out_w), lambda i: (i, 0)),
        compiler_params=pltpu.CompilerParams(dimension_semantics=("parallel",)),
    )(y_flat, w1, b1, w2, b2, w3, b3)
    # Un-pad the batch and drop the lane-alignment pad columns (fused in jit).
    return out[:Bb, :out_w_logical]


# ---- NBEATSModule.forward (jit-cached glue around the single kernel) ---------
@jax.jit
def nbeats_forward(encoder_y, encoder_x_t, decoder_x_t, fused_params):
    del encoder_x_t, decoder_x_t          # covariate_size == 0 -> unused
    Bb, L, C = encoder_y.shape
    H = PREDICTION_LENGTH
    LH = L + H
    n_blocks = N_BLOCKS_TOTAL

    y_flat = encoder_y[:, :, 0]           # [B, L] lane-dense slab (C == 1)
    out = nbeats_fused_apply(y_flat, fused_params, context_length=L,
                             prediction_length=H, n_blocks=n_blocks,
                             naive_level=NAIVE_LEVEL)

    # Last H columns already hold the accumulated forecast (all blocks + naive
    # level, folded into the fused W3/b3 and the in-kernel masked add).
    forecast = out[:, n_blocks * LH:][:, :, None]        # [B, H, 1]

    last = encoder_y[:, -1:, :]                          # [B, 1, C]
    level_fore = jnp.repeat(last, H, axis=1)
    level_back = jnp.repeat(last, L, axis=1)

    if NAIVE_LEVEL:
        block_backcasts = [level_back]
        block_forecasts = [level_fore]
    else:
        block_backcasts, block_forecasts = [], []

    for b in range(n_blocks):
        theta_b = out[:, b * LH: (b + 1) * LH]
        # reshape(-1, len(output_size), L).transpose(1,2)  -> [B, L, 1]
        block_backcasts.append(theta_b[:, :L][:, :, None])
        # reshape(-1, sum(output_size), H).transpose(1,2)  -> [B, H, 1]
        block_forecasts.append(theta_b[:, L:][:, :, None])

    # TODO(synk): residual (backcast) subtraction between blocks is not applied;
    # residuals stay fixed (same semantics as the previously-validated reference)
    # so `backcast` returned here is the untouched input.
    backcast = encoder_y
    return (forecast, backcast,
            jnp.stack(block_forecasts, axis=-1),
            jnp.stack(block_backcasts, axis=-1))


# ---- deterministic parameter init (glorot_uniform-style) ---------------------
def make_block_params(key, in_dim, hidden, n_theta):
    dims = [in_dim] + list(hidden) + [n_theta]
    params = []
    for i in range(len(dims) - 1):
        key, kw, kb = jax.random.split(key, 3)
        fan_in, fan_out = dims[i], dims[i + 1]
        limit = float(np.sqrt(6.0 / (fan_in + fan_out)))
        w = jax.random.uniform(kw, (fan_in, fan_out), jnp.float32, -limit, limit)
        blim = float(1.0 / np.sqrt(fan_in))
        b = jax.random.uniform(kb, (1, fan_out), jnp.float32, -blim, blim)
        params += [w, b]
    return key, tuple(params)


def _block_diag(mats):
    rows = sum(m.shape[0] for m in mats)
    cols = sum(m.shape[1] for m in mats)
    out = jnp.zeros((rows, cols), jnp.float32)
    r = c = 0
    for m in mats:
        out = out.at[r:r + m.shape[0], c:c + m.shape[1]].set(m)
        r += m.shape[0]
        c += m.shape[1]
    return out


def fuse_block_params(block_params, *, context_length, prediction_length, pool,
                      lane_align=64):
    """Fuse all blocks' Linear weights so one bf16 matmul chain evaluates every
    block at once, and augment the last layer so it also emits the accumulated
    forecast.

    * W1: lane-expanded to [L, hidden] — row pool*k carries pooled feature k
      (the in-kernel pairwise max lives at even columns), other rows are zero;
      all blocks' columns are concatenated.
    * W2 / W3: block-diagonal; biases column-concatenated.
    * W3/b3 extra columns: sum over blocks of the identity-basis forecast slice
      theta[:, L:L+H], then zero-padded so the kernel's output width is
      lane-aligned (56 -> 64) and the store is one full-width block store.
    * Weights are stored bf16 (single-pass MXU); biases stay f32.
    """
    L, H = context_length, prediction_length
    LH = L + H
    n_blocks = len(block_params)
    assert L % pool == 0, "TODO(synk): ceil_mode padding for L % pool != 0"

    w1e, b1s, w2s, b2s, w3s, b3s, w3fore, b3fore = [], [], [], [], [], [], [], []
    for (w1, b1, w2, b2, w3, b3) in block_params:
        e = jnp.zeros((L, w1.shape[1]), jnp.float32).at[0::pool, :].set(w1)
        w1e.append(e); b1s.append(b1)
        w2s.append(w2); b2s.append(b2)
        w3s.append(w3); b3s.append(b3)
        w3fore.append(w3[:, L:LH])         # identity-basis forecast weight slice
        b3fore.append(b3[:, L:LH])

    w1_f = jnp.concatenate(w1e, axis=1)
    b1_f = jnp.concatenate(b1s, axis=1)
    w2_f = _block_diag(w2s)
    b2_f = jnp.concatenate(b2s, axis=1)
    w3_f = jnp.concatenate([_block_diag(w3s),
                            jnp.concatenate(w3fore, axis=0)], axis=1)
    b3_f = jnp.concatenate(b3s + [jnp.sum(jnp.stack(b3fore, axis=0), axis=0)], axis=1)

    out_w = n_blocks * LH + H
    out_w_pad = _round_up(out_w, lane_align)
    if out_w_pad > out_w:
        w3_f = jnp.pad(w3_f, ((0, 0), (0, out_w_pad - out_w)))
        b3_f = jnp.pad(b3_f, ((0, 0), (0, out_w_pad - out_w)))

    return (w1_f.astype(jnp.bfloat16), b1_f,
            w2_f.astype(jnp.bfloat16), b2_f,
            w3_f.astype(jnp.bfloat16), b3_f)


if __name__ == "__main__":
    key = jax.random.PRNGKey(0)
    key, ky, kx1, kx2, kp = jax.random.split(key, 5)
    encoder_y = jax.random.normal(ky, (B, CONTEXT_LENGTH, len(OUTPUT_SIZE)), jnp.float32)
    # covariate_size == 0 -> accepted but unused (matches torch branch)
    encoder_x_t = jax.random.normal(kx1, (B, CONTEXT_LENGTH, 1), jnp.float32)
    decoder_x_t = jax.random.normal(kx2, (B, PREDICTION_LENGTH, 1), jnp.float32)

    Lp = int(np.ceil(CONTEXT_LENGTH / POOL))
    in_dim = Lp * len(OUTPUT_SIZE) + (CONTEXT_LENGTH + PREDICTION_LENGTH) * COVARIATE_SIZE
    # identity-interpolation shortcut is only exact because n_theta == L + H
    assert N_THETA == CONTEXT_LENGTH + PREDICTION_LENGTH

    block_params = []
    pkey = kp
    for _ in range(N_BLOCKS_TOTAL):
        pkey, params = make_block_params(pkey, in_dim, HIDDEN_SIZE[0], N_THETA)
        block_params.append(params)

    fused_params = fuse_block_params(block_params, context_length=CONTEXT_LENGTH,
                                     prediction_length=PREDICTION_LENGTH, pool=POOL)

    outs = nbeats_forward(encoder_y, encoder_x_t, decoder_x_t, fused_params)
    forecast, backcast, block_forecasts, block_backcasts = jax.block_until_ready(outs)

    # --- pure-JAX reference of the unfused per-block hot path -----------------
    # (mirrors the kernel's bf16 matmul operands; f32 accumulation)
    def reference_forward(enc_y):
        nb = enc_y.shape[0]
        lvl = enc_y[:, -1:, :]
        fore = jnp.repeat(lvl, PREDICTION_LENGTH, axis=1)
        bbs = [jnp.repeat(lvl, CONTEXT_LENGTH, axis=1)]
        bfs = [jnp.repeat(lvl, PREDICTION_LENGTH, axis=1)]
        y_pool = enc_y[:, :, 0].reshape(nb, Lp, POOL).max(axis=-1)

        def lin(x, w, bias):
            return jnp.dot(x.astype(jnp.bfloat16), w.astype(jnp.bfloat16),
                           preferred_element_type=jnp.float32) + bias

        for (w1, b1, w2, b2, w3, b3) in block_params:
            h = jnp.maximum(lin(y_pool, w1, b1), 0.0)
            h = jnp.maximum(lin(h, w2, b2), 0.0)
            t = lin(h, w3, b3)
            rb = t[:, :CONTEXT_LENGTH][:, :, None]
            rf = t[:, CONTEXT_LENGTH:][:, :, None]
            fore = fore + rf
            bbs.append(rb)
            bfs.append(rf)
        return fore, jnp.stack(bfs, axis=-1), jnp.stack(bbs, axis=-1)

    ref_fore, ref_bf, ref_bb = reference_forward(encoder_y)

    # tolerance covers bf16 matmul operands + MXU-vs-XLA accumulation (values O(1))
    assert np.allclose(np.asarray(forecast), np.asarray(ref_fore), atol=1e-2, rtol=1e-2)
    assert np.allclose(np.asarray(block_forecasts), np.asarray(ref_bf), atol=1e-2, rtol=1e-2)
    assert np.allclose(np.asarray(block_backcasts), np.asarray(ref_bb), atol=1e-2, rtol=1e-2)

    n_stacked = N_BLOCKS_TOTAL + 1  # +1 for the naive-level entries
    assert forecast.shape == (B, PREDICTION_LENGTH, sum(OUTPUT_SIZE))
    assert backcast.shape == (B, CONTEXT_LENGTH, len(OUTPUT_SIZE))
    assert block_forecasts.shape == (B, PREDICTION_LENGTH, sum(OUTPUT_SIZE), n_stacked)
    assert block_backcasts.shape == (B, CONTEXT_LENGTH, len(OUTPUT_SIZE), n_stacked)

    # --- ragged-batch path: batch padding + >=2 parallel grid steps (v7x) -----
    B2 = 100   # pads to a multiple of the chosen tile, 2 grid steps
    enc_y2 = jax.random.normal(jax.random.PRNGKey(1),
                               (B2, CONTEXT_LENGTH, len(OUTPUT_SIZE)), jnp.float32)
    out2 = nbeats_forward(enc_y2,
                          jnp.zeros((B2, CONTEXT_LENGTH, 1), jnp.float32),
                          jnp.zeros((B2, PREDICTION_LENGTH, 1), jnp.float32),
                          fused_params)
    fore2 = jax.block_until_ready(out2[0])
    ref_fore2, _, _ = reference_forward(enc_y2)
    assert fore2.shape == (B2, PREDICTION_LENGTH, sum(OUTPUT_SIZE))
    assert np.allclose(np.asarray(fore2), np.asarray(ref_fore2), atol=1e-2, rtol=1e-2)

    print("KERNEL_OK")
</pallas_src>

<mosaic_0001>
module attributes {stable_mosaic.version = 11 : i64} {
  func.func @_nbeats_fused_kernel(%arg0: i32, %arg1: memref<8x16xf32, #tpu.memory_space<vmem>>, %arg2: memref<16x64xbf16, #tpu.memory_space<vmem>>, %arg3: memref<1x64xf32, #tpu.memory_space<vmem>>, %arg4: memref<64x64xbf16, #tpu.memory_space<vmem>>, %arg5: memref<1x64xf32, #tpu.memory_space<vmem>>, %arg6: memref<64x64xbf16, #tpu.memory_space<vmem>>, %arg7: memref<1x64xf32, #tpu.memory_space<vmem>>, %arg8: memref<8x64xf32, #tpu.memory_space<vmem>>) attributes {dimension_semantics = [#tpu.dimension_semantics<parallel>], iteration_bounds = array<i64: 1>, scalar_prefetch = 0 : i64, scratch_operands = 0 : i64, tpu.core_type = #tpu.core_type<tc>, window_params = [{transform_indices = @transform_0, window_bounds = array<i64: 8, 16>}, {pipeline_mode = #tpu.pipeline_mode<synchronous>, transform_indices = @transform_1, window_bounds = array<i64: 16, 64>}, {pipeline_mode = #tpu.pipeline_mode<synchronous>, transform_indices = @transform_2, window_bounds = array<i64: 1, 64>}, {pipeline_mode = #tpu.pipeline_mode<synchronous>, transform_indices = @transform_3, window_bounds = array<i64: 64, 64>}, {pipeline_mode = #tpu.pipeline_mode<synchronous>, transform_indices = @transform_4, window_bounds = array<i64: 1, 64>}, {pipeline_mode = #tpu.pipeline_mode<synchronous>, transform_indices = @transform_5, window_bounds = array<i64: 64, 64>}, {pipeline_mode = #tpu.pipeline_mode<synchronous>, transform_indices = @transform_6, window_bounds = array<i64: 1, 64>}, {transform_indices = @transform_7, window_bounds = array<i64: 8, 64>}]} {
    %c0 = arith.constant 0 : index
    %c0_0 = arith.constant 0 : index
    %0 = vector.load %arg1[%c0, %c0_0] : memref<8x16xf32, #tpu.memory_space<vmem>>, vector<8x16xf32>
    %1 = vector.extract_strided_slice %0 {offsets = [0, 1], sizes = [8, 15], strides = [1, 1]} : vector<8x16xf32> to vector<8x15xf32>
    %2 = vector.extract_strided_slice %0 {offsets = [0, 0], sizes = [8, 1], strides = [1, 1]} : vector<8x16xf32> to vector<8x1xf32>
    %3 = tpu.concatenate %1, %2 in 1 : vector<8x15xf32>, vector<8x1xf32> -> vector<8x16xf32>
    %4 = arith.maximumf %0, %3 : vector<8x16xf32>
    %5 = arith.truncf %4 : vector<8x16xf32> to vector<8x16xbf16>
    %c0_1 = arith.constant 0 : index
    %c0_2 = arith.constant 0 : index
    %6 = vector.load %arg2[%c0_1, %c0_2] : memref<16x64xbf16, #tpu.memory_space<vmem>>, vector<16x64xbf16>
    %cst = arith.constant dense<0.000000e+00> : vector<8x64xf32>
    %7 = tpu.matmul %5, %6, %cst {dimension_numbers = #tpu.dot_dimension_numbers<[1], [0], [0], [1], [0, 0, 1, 1], [], []>} : vector<8x16xbf16>, vector<16x64xbf16>, vector<8x64xf32> -> vector<8x64xf32>
    %c0_3 = arith.constant 0 : index
    %c0_4 = arith.constant 0 : index
    %8 = vector.load %arg3[%c0_3, %c0_4] : memref<1x64xf32, #tpu.memory_space<vmem>>, vector<1x64xf32>
    %9 = vector.broadcast %8 : vector<1x64xf32> to vector<8x64xf32>
    %10 = arith.addf %7, %9 : vector<8x64xf32>
    %cst_5 = arith.constant 0.000000e+00 : f32
    %11 = vector.broadcast %cst_5 : f32 to vector<8x64xf32>
    %12 = arith.maximumf %10, %11 : vector<8x64xf32>
    %13 = arith.truncf %12 : vector<8x64xf32> to vector<8x64xbf16>
    %c0_6 = arith.constant 0 : index
    %c0_7 = arith.constant 0 : index
    %14 = vector.load %arg4[%c0_6, %c0_7] : memref<64x64xbf16, #tpu.memory_space<vmem>>, vector<64x64xbf16>
    %cst_8 = arith.constant dense<0.000000e+00> : vector<8x64xf32>
    %15 = tpu.matmul %13, %14, %cst_8 {dimension_numbers = #tpu.dot_dimension_numbers<[1], [0], [0], [1], [0, 0, 1, 1], [], []>} : vector<8x64xbf16>, vector<64x64xbf16>, vector<8x64xf32> -> vector<8x64xf32>
    %c0_9 = arith.constant 0 : index
    %c0_10 = arith.constant 0 : index
    %16 = vector.load %arg5[%c0_9, %c0_10] : memref<1x64xf32, #tpu.memory_space<vmem>>, vector<1x64xf32>
    %17 = vector.broadcast %16 : vector<1x64xf32> to vector<8x64xf32>
    %18 = arith.addf %15, %17 : vector<8x64xf32>
    %cst_11 = arith.constant 0.000000e+00 : f32
    %19 = vector.broadcast %cst_11 : f32 to vector<8x64xf32>
    %20 = arith.maximumf %18, %19 : vector<8x64xf32>
    %21 = arith.truncf %20 : vector<8x64xf32> to vector<8x64xbf16>
    %c0_12 = arith.constant 0 : index
    %c0_13 = arith.constant 0 : index
    %22 = vector.load %arg6[%c0_12, %c0_13] : memref<64x64xbf16, #tpu.memory_space<vmem>>, vector<64x64xbf16>
    %cst_14 = arith.constant dense<0.000000e+00> : vector<8x64xf32>
    %23 = tpu.matmul %21, %22, %cst_14 {dimension_numbers = #tpu.dot_dimension_numbers<[1], [0], [0], [1], [0, 0, 1, 1], [], []>} : vector<8x64xbf16>, vector<64x64xbf16>, vector<8x64xf32> -> vector<8x64xf32>
    %c0_15 = arith.constant 0 : index
    %c0_16 = arith.constant 0 : index
    %24 = vector.load %arg7[%c0_15, %c0_16] : memref<1x64xf32, #tpu.memory_space<vmem>>, vector<1x64xf32>
    %25 = vector.broadcast %24 : vector<1x64xf32> to vector<8x64xf32>
    %26 = arith.addf %23, %25 : vector<8x64xf32>
    %27 = tpu.iota {dimensions = array<i32: 1>} : vector<1x64xi32>
    %c48_i32 = arith.constant 48 : i32
    %28 = vector.broadcast %c48_i32 : i32 to vector<1x64xi32>
    %29 = arith.cmpi sge, %27, %28 : vector<1x64xi32>
    %c56_i32 = arith.constant 56 : i32
    %30 = vector.broadcast %c56_i32 : i32 to vector<1x64xi32>
    %31 = arith.cmpi slt, %27, %30 : vector<1x64xi32>
    %32 = arith.andi %29, %31 : vector<1x64xi1>
    %33 = vector.extract_strided_slice %0 {offsets = [0, 15], sizes = [8, 1], strides = [1, 1]} : vector<8x16xf32> to vector<8x1xf32>
    %cst_17 = arith.constant 0.000000e+00 : f32
    %34 = vector.shape_cast %32 : vector<1x64xi1> to vector<1x64xi1>
    %35 = vector.broadcast %34 : vector<1x64xi1> to vector<8x64xi1>
    %36 = vector.shape_cast %33 : vector<8x1xf32> to vector<8x1xf32>
    %37 = vector.broadcast %36 : vector<8x1xf32> to vector<8x64xf32>
    %38 = vector.broadcast %cst_17 : f32 to vector<8x64xf32>
    %39 = arith.select %35, %37, %38 : vector<8x64xi1>, vector<8x64xf32>
    %40 = arith.addf %26, %39 : vector<8x64xf32>
    %c0_18 = arith.constant 0 : index
    %c0_19 = arith.constant 0 : index
    %41 = vector.load %arg8[%c0_18, %c0_19] : memref<8x64xf32, #tpu.memory_space<vmem>>, vector<8x64xf32>
    tpu.vector_store %arg8[%c0_18, %c0_19], %40 {strides = array<i32>} : memref<8x64xf32, #tpu.memory_space<vmem>>, vector<8x64xf32>,
    return
  }
  func.func @transform_0(%arg0: i32) -> (i32, i32) {
    %c0_i32 = arith.constant 0 : i32
    %c0_i32_0 = arith.constant 0 : i32
    return %arg0, %c0_i32 : i32, i32
  }
  func.func @transform_1(%arg0: i32) -> (i32, i32) {
    %c0_i32 = arith.constant 0 : i32
    %c0_i32_0 = arith.constant 0 : i32
    %c0_i32_1 = arith.constant 0 : i32
    return %c0_i32, %c0_i32_0 : i32, i32
  }
  func.func @transform_2(%arg0: i32) -> (i32, i32) {
    %c0_i32 = arith.constant 0 : i32
    %c0_i32_0 = arith.constant 0 : i32
    %c0_i32_1 = arith.constant 0 : i32
    return %c0_i32, %c0_i32_0 : i32, i32
  }
  func.func @transform_3(%arg0: i32) -> (i32, i32) {
    %c0_i32 = arith.constant 0 : i32
    %c0_i32_0 = arith.constant 0 : i32
    %c0_i32_1 = arith.constant 0 : i32
    return %c0_i32, %c0_i32_0 : i32, i32
  }
  func.func @transform_4(%arg0: i32) -> (i32, i32) {
    %c0_i32 = arith.constant 0 : i32
    %c0_i32_0 = arith.constant 0 : i32
    %c0_i32_1 = arith.constant 0 : i32
    return %c0_i32, %c0_i32_0 : i32, i32
  }
  func.func @transform_5(%arg0: i32) -> (i32, i32) {
    %c0_i32 = arith.constant 0 : i32
    %c0_i32_0 = arith.constant 0 : i32
    %c0_i32_1 = arith.constant 0 : i32
    return %c0_i32, %c0_i32_0 : i32, i32
  }
  func.func @transform_6(%arg0: i32) -> (i32, i32) {
    %c0_i32 = arith.constant 0 : i32
    %c0_i32_0 = arith.constant 0 : i32
    %c0_i32_1 = arith.constant 0 : i32
    return %c0_i32, %c0_i32_0 : i32, i32
  }
  func.func @transform_7(%arg0: i32) -> (i32, i32) {
    %c0_i32 = arith.constant 0 : i32
    %c0_i32_0 = arith.constant 0 : i32
    return %arg0, %c0_i32 : i32, i32
  }
}

</mosaic_0001>

<llo_original>
// kernel: nbeats_forward.1
$region0: #{nbeats_forward.1}
  #allocation0 [shape = 'u32[]', space=smem, size = 0x4, offset = 0x4, fixed_abs, tag = 'smem constant byte address 0x4 - core index']
  #allocation1 [shape = 'u32[144,128]{1,0:T(1,128)}', space=vmem, size = 0x12000, scoped, tag = 'internal scratch']
  %s0 = inlined_call_operand.vmem [shape: f32[8,16], index: 0, kind: input, shape index: {}]
  %s1 = inlined_call_operand.vmem [shape: bf16[16,64], index: 1, kind: input, shape index: {}]
  %s2 = inlined_call_operand.vmem [shape: f32[1,64], index: 2, kind: input, shape index: {}]
  %s3 = inlined_call_operand.hbm [shape: bf16[64,64], index: 3, kind: input, shape index: {}]
  %s4 = inlined_call_operand.vmem [shape: f32[1,64], index: 4, kind: input, shape index: {}]
  %s5 = inlined_call_operand.hbm [shape: bf16[64,64], index: 5, kind: input, shape index: {}]
  %s6 = inlined_call_operand.hbm [shape: f32[1,64], index: 6, kind: input, shape index: {}]
  %s7 = inlined_call_operand.vmem [shape: f32[8,64], index: 7, kind: output, shape index: {}]
  %s8 = sld [smem:[#allocation0]]
  $region50: #{nbeats_forward.1} parent=0
    _
  %s10 = ssub.s32 1, %s8
  %s11 = scalar_select 0, %s10, %s8
  $region1: #{nbeats_forward.1} parent=0
    #allocation2 [shape = 'u8[16384]{0}', space=vmem, size = 0x4000, scoped, tag = 'input window, operand 3, single buffered']
    #allocation3 [shape = 's32[1]{0}', space=sflag, size = 0x4, scoped, tag = 'scoped memory for nbeats_forward.1']
    #allocation4 [shape = 'u8[16384]{0}', space=vmem, size = 0x4000, scoped, tag = 'input window, operand 5, single buffered']
    #allocation5 [shape = 's32[1]{0}', space=sflag, size = 0x4, scoped, tag = 'scoped memory for nbeats_forward.1']
    #allocation6 [shape = 'u8[512]{0}', space=vmem, size = 0x400, scoped, tag = 'input window, operand 6, single buffered']
    %12 = vsyncpa [#allocation3], 0
    %13 = vsyncpa [#allocation5], 0
    // Predicated region
    $region2: #{nbeats_forward.1} parent=1 // pred_check
      _
    $region3: #{nbeats_forward.1} parent=1 // pred_check_branch
      %15 = sbr.rel (0) target = $region5
    $region4: #{nbeats_forward.1} parent=1 // pred_region
      _
    $region5: #{nbeats_forward.1} parent=1 // pred_fallthru
      _
    // Predicated region
    $region6: #{nbeats_forward.1} parent=1 // pred_check
      _
    $region7: #{nbeats_forward.1} parent=1 // pred_check_branch
      %17 = sbr.rel (0) target = $region9
    $region8: #{nbeats_forward.1} parent=1 // pred_region
      _
    $region9: #{nbeats_forward.1} parent=1 // pred_fallthru
      _
    // Predicated region
    $region10: #{nbeats_forward.1} parent=1 // pred_check
      _
    $region11: #{nbeats_forward.1} parent=1 // pred_check_branch
      %19 = sbr.rel (0) target = $region13
    $region12: #{nbeats_forward.1} parent=1 // pred_region
      _
    $region13: #{nbeats_forward.1} parent=1 // pred_fallthru
      _
    // Predicated region
    $region14: #{nbeats_forward.1} parent=1 // pred_check
      _
    $region15: #{nbeats_forward.1} parent=1 // pred_check_branch
      %21 = sbr.rel (0) target = $region17
    $region16: #{nbeats_forward.1} parent=1 // pred_region
      %s23 = ssub.s32 512, 512
      %24 = vsyncadd [#allocation3], %s23
      %s25 = sshll.u32 [#allocation2], 4
      %s26 = int_to_ptr.vmem [resolvable:$true] %s25
      %31 = dma.hbm_to_vmem [thread:$0]  %s3, 512, %s26, [#allocation3], 64, 64, 4
    $region17: #{nbeats_forward.1} parent=1 // pred_fallthru
      _
    // Predicated region
    $region18: #{nbeats_forward.1} parent=1 // pred_check
      _
    $region19: #{nbeats_forward.1} parent=1 // pred_check_branch
      %33 = sbr.rel (0) target = $region21
    $region20: #{nbeats_forward.1} parent=1 // pred_region
      _
    $region21: #{nbeats_forward.1} parent=1 // pred_fallthru
      _
    // Predicated region
    $region22: #{nbeats_forward.1} parent=1 // pred_check
      _
    $region23: #{nbeats_forward.1} parent=1 // pred_check_branch
      %35 = sbr.rel (0) target = $region25
    $region24: #{nbeats_forward.1} parent=1 // pred_region
      %s37 = ssub.s32 512, 512
      %38 = vsyncadd [#allocation5], %s37
      %s39 = sshll.u32 [#allocation4], 4
      %s40 = int_to_ptr.vmem [resolvable:$true] %s39
      %45 = dma.hbm_to_vmem [thread:$0]  %s5, 512, %s40, [#allocation5], 64, 64, 4
    $region25: #{nbeats_forward.1} parent=1 // pred_fallthru
      _
    // Predicated region
    $region26: #{nbeats_forward.1} parent=1 // pred_check
      _
    $region27: #{nbeats_forward.1} parent=1 // pred_check_branch
      %47 = sbr.rel (0) target = $region29
    $region28: #{nbeats_forward.1} parent=1 // pred_region
      %s49 = ssub.s32 16, 16
      %50 = vsyncadd [#allocation5], %s49
      %s52 = sshll.u32 [#allocation6], 4
      %s53 = int_to_ptr.vmem [resolvable:$true] %s52
      %55 = dma.hbm_to_vmem [thread:$0]  %s6, 16, %s53, [#allocation5]
    $region29: #{nbeats_forward.1} parent=1 // pred_fallthru
      _
    // Predicated region
    $region30: #{nbeats_forward.1} parent=1 // pred_check
      _
    $region31: #{nbeats_forward.1} parent=1 // pred_check_branch
      %57 = sbr.rel (0) target = $region33
    $region32: #{nbeats_forward.1} parent=1 // pred_region
      %58 = dma.done [#allocation3], 512
    $region33: #{nbeats_forward.1} parent=1 // pred_fallthru
      _
    // Predicated region
    $region34: #{nbeats_forward.1} parent=1 // pred_check
      _
    $region35: #{nbeats_forward.1} parent=1 // pred_check_branch
      %60 = sbr.rel (0) target = $region37
    $region36: #{nbeats_forward.1} parent=1 // pred_region
      %61 = dma.done [#allocation5], 512
    $region37: #{nbeats_forward.1} parent=1 // pred_fallthru
      _
    // Predicated region
    $region38: #{nbeats_forward.1} parent=1 // pred_check
      _
    $region39: #{nbeats_forward.1} parent=1 // pred_check_branch
      %63 = sbr.rel (0) target = $region41
    $region40: #{nbeats_forward.1} parent=1 // pred_region
      %64 = dma.done [#allocation5], 16
    $region41: #{nbeats_forward.1} parent=1 // pred_fallthru
      _
    %v66 = vld [vmem:[%s0] sm:$0xff]
    %68 = vrot.lane.b32.xlu0 %v66, 127
    %v69 = vpop.permute.xlu0 %68
    %71 = vrot.lane.b32.xlu0 %v66, 15
    %v72 = vpop.permute.xlu0 %71
    %vm74 = vcmask 121856
    %v75 = vsel %vm74, %v69, %v72
    %v76 = vmax.f32 %v66, %v75
    %v77 = vpack.c.bf16 %v76, %v76
    %v78 = vld [vmem:[%s1] sm:$0xf]
    %v79 = vld [vmem:[%s1 + $0x4] sm:$0xf]
    %v80 = vld [vmem:[%s2] sm:$0x1]
    %v82 = vlaneseq
    %v83 = vshrl.u32 %v82, 7
    %v84 = vsub.s32 0, %v83
    %v85 = vrot.slane %v80, %v84
    %v89 = vunpack.c.l.b16 %v78
    %v90 = vunpack.c.l.b16 %v79
    %v91 = vpack.c.b16 %v90, %v89
    %vm93 = vcmask 130048
    %v95 = vsel %vm93, %v77, 0
    %97 = vmatprep.subr.bf16.mxu0 0
    %98 = vmatpush1.bf16.msra.mxu0 %v91
    %99 = vmatprep.subr.bf16.mxu0 0
    %100 = vmatpush1.bf16.msra.mxu0 0
    %101 = vmatprep.subr.bf16.mxu0 0
    %102 = vmatpush1.bf16.msra.mxu0 0
    %103 = vmatprep.subr.bf16.mxu0 0
    %104 = vmatpush1.bf16.msra.mxu0 0
    %105 = vmatprep.subr.bf16.mxu0 0
    %106 = vmatpush1.bf16.msra.mxu0 0
    %107 = vmatprep.subr.bf16.mxu0 0
    %108 = vmatpush1.bf16.msra.mxu0 0
    %109 = vmatprep.subr.bf16.mxu0 0
    %110 = vmatpush1.bf16.msra.mxu0 0
    %111 = vmatprep.subr.bf16.mxu0 0
    %112 = vmatpush1.bf16.msra.mxu0 0
    %113 = vmatprep.subr.bf16.mxu0 0
    %114 = vmatpush1.bf16.msra.mxu0 0
    %115 = vmatprep.subr.bf16.mxu0 0
    %116 = vmatpush1.bf16.msra.mxu0 0
    %117 = vmatprep.subr.bf16.mxu0 0
    %118 = vmatpush1.bf16.msra.mxu0 0
    %119 = vmatprep.subr.bf16.mxu0 0
    %120 = vmatpush1.bf16.msra.mxu0 0
    %121 = vmatprep.subr.bf16.mxu0 0
    %122 = vmatpush1.bf16.msra.mxu0 0
    %123 = vmatprep.subr.bf16.mxu0 0
    %124 = vmatpush1.bf16.msra.mxu0 0
    %125 = vmatprep.subr.bf16.mxu0 0
    %126 = vmatpush1.bf16.msra.mxu0 0
    %127 = vmatprep.subr.bf16.mxu0 0
    %128 = vmatpush1.bf16.msra.mxu0 0
    %129 = vmatprep.mubr.bf16.mxu0 0
    %130 = vmatmul.mubr.bf16.gmra.mrb[0].mxu0 %v95
    %v131 = vpop.f32.mrb[0].mxu0
    %v132 = vadd.f32 %v85, %v131
    %v133 = vpop.f32.mrb[0].mxu0
    %v134 = vpop.f32.mrb[0].mxu0
    %v135 = vpop.f32.mrb[0].mxu0
    %136 = vdwg.mxu0
    %v137 = vmax.f32 %v132, 0.0
    %v138 = vpack.c.bf16 %v137, %v137
    %v139 = vld [vmem:[#allocation2] sm:$0xf]
    %v140 = vld [vmem:[#allocation2 + $0x4] sm:$0xf]
    %v141 = vld [vmem:[#allocation2 + $0x8] sm:$0xf]
    %v142 = vld [vmem:[#allocation2 + $0xc] sm:$0xf]
    %v143 = vld [vmem:[#allocation2 + $0x10] sm:$0xf]
    %v144 = vld [vmem:[#allocation2 + $0x14] sm:$0xf]
    %v145 = vld [vmem:[#allocation2 + $0x18] sm:$0xf]
    %v146 = vld [vmem:[#allocation2 + $0x1c] sm:$0xf]
    %v147 = vld [vmem:[%s4] sm:$0x1]
    %v149 = vlaneseq
    %v150 = vshrl.u32 %v149, 7
    %v151 = vsub.s32 0, %v150
    %v152 = vrot.slane %v147, %v151
    %v162 = vunpack.c.l.b16 %v139
    %v163 = vunpack.c.l.b16 %v140
    %v164 = vunpack.c.l.b16 %v141
    %v165 = vunpack.c.l.b16 %v142
    %v166 = vunpack.c.l.b16 %v143
    %v167 = vunpack.c.l.b16 %v144
    %v168 = vunpack.c.l.b16 %v145
    %v169 = vunpack.c.l.b16 %v146
    %v170 = vpack.c.b16 %v163, %v162
    %v171 = vpack.c.b16 %v165, %v164
    %v172 = vpack.c.b16 %v167, %v166
    %v173 = vpack.c.b16 %v169, %v168
    %vm178 = vcmask 523264
    %v180 = vsel %vm178, %v138, 0
    %182 = vmatprep.subr.bf16.mxu0 0
    %183 = vmatpush1.bf16.msra.mxu0 %v170
    %184 = vmatprep.subr.bf16.mxu0 0
    %185 = vmatpush1.bf16.msra.mxu0 %v171
    %186 = vmatprep.subr.bf16.mxu0 0
    %187 = vmatpush1.bf16.msra.mxu0 %v172
    %188 = vmatprep.subr.bf16.mxu0 0
    %189 = vmatpush1.bf16.msra.mxu0 %v173
    %190 = vmatprep.subr.bf16.mxu0 0
    %191 = vmatpush1.bf16.msra.mxu0 0
    %192 = vmatprep.subr.bf16.mxu0 0
    %193 = vmatpush1.bf16.msra.mxu0 0
    %194 = vmatprep.subr.bf16.mxu0 0
    %195 = vmatpush1.bf16.msra.mxu0 0
    %196 = vmatprep.subr.bf16.mxu0 0
    %197 = vmatpush1.bf16.msra.mxu0 0
    %198 = vmatprep.subr.bf16.mxu0 0
    %199 = vmatpush1.bf16.msra.mxu0 0
    %200 = vmatprep.subr.bf16.mxu0 0
    %201 = vmatpush1.bf16.msra.mxu0 0
    %202 = vmatprep.subr.bf16.mxu0 0
    %203 = vmatpush1.bf16.msra.mxu0 0
    %204 = vmatprep.subr.bf16.mxu0 0
    %205 = vmatpush1.bf16.msra.mxu0 0
    %206 = vmatprep.subr.bf16.mxu0 0
    %207 = vmatpush1.bf16.msra.mxu0 0
    %208 = vmatprep.subr.bf16.mxu0 0
    %209 = vmatpush1.bf16.msra.mxu0 0
    %210 = vmatprep.subr.bf16.mxu0 0
    %211 = vmatpush1.bf16.msra.mxu0 0
    %212 = vmatprep.subr.bf16.mxu0 0
    %213 = vmatpush1.bf16.msra.mxu0 0
    %214 = vmatprep.mubr.bf16.mxu0 0
    %215 = vmatmul.mubr.bf16.gmra.mrb[0].mxu0 %v180
    %v216 = vpop.f32.mrb[0].mxu0
    %v217 = vadd.f32 %v152, %v216
    %v218 = vpop.f32.mrb[0].mxu0
    %v219 = vpop.f32.mrb[0].mxu0
    %v220 = vpop.f32.mrb[0].mxu0
    %221 = vdwg.mxu0
    %v222 = vmax.f32 %v217, 0.0
    %v223 = vpack.c.bf16 %v222, %v222
    %v224 = vld [vmem:[#allocation4] sm:$0xf]
    %v225 = vld [vmem:[#allocation4 + $0x4] sm:$0xf]
    %v226 = vld [vmem:[#allocation4 + $0x8] sm:$0xf]
    %v227 = vld [vmem:[#allocation4 + $0xc] sm:$0xf]
    %v228 = vld [vmem:[#allocation4 + $0x10] sm:$0xf]
    %v229 = vld [vmem:[#allocation4 + $0x14] sm:$0xf]
    %v230 = vld [vmem:[#allocation4 + $0x18] sm:$0xf]
    %v231 = vld [vmem:[#allocation4 + $0x1c] sm:$0xf]
    %v232 = vld [vmem:[#allocation6] sm:$0x1]
    %v234 = vlaneseq
    %v235 = vshrl.u32 %v234, 7
    %v236 = vsub.s32 0, %v235
    %v237 = vrot.slane %v232, %v236
    %v247 = vunpack.c.l.b16 %v224
    %v248 = vunpack.c.l.b16 %v225
    %v249 = vunpack.c.l.b16 %v226
    %v250 = vunpack.c.l.b16 %v227
    %v251 = vunpack.c.l.b16 %v228
    %v252 = vunpack.c.l.b16 %v229
    %v253 = vunpack.c.l.b16 %v230
    %v254 = vunpack.c.l.b16 %v231
    %v255 = vpack.c.b16 %v248, %v247
    %v256 = vpack.c.b16 %v250, %v249
    %v257 = vpack.c.b16 %v252, %v251
    %v258 = vpack.c.b16 %v254, %v253
    %v264 = vsel %vm178, %v223, 0
    %266 = vmatprep.subr.bf16.mxu0 0
    %267 = vmatpush1.bf16.msra.mxu0 %v255
    %268 = vmatprep.subr.bf16.mxu0 0
    %269 = vmatpush1.bf16.msra.mxu0 %v256
    %270 = vmatprep.subr.bf16.mxu0 0
    %271 = vmatpush1.bf16.msra.mxu0 %v257
    %272 = vmatprep.subr.bf16.mxu0 0
    %273 = vmatpush1.bf16.msra.mxu0 %v258
    %274 = vmatprep.subr.bf16.mxu0 0
    %275 = vmatpush1.bf16.msra.mxu0 0
    %276 = vmatprep.subr.bf16.mxu0 0
    %277 = vmatpush1.bf16.msra.mxu0 0
    %278 = vmatprep.subr.bf16.mxu0 0
    %279 = vmatpush1.bf16.msra.mxu0 0
    %280 = vmatprep.subr.bf16.mxu0 0
    %281 = vmatpush1.bf16.msra.mxu0 0
    %282 = vmatprep.subr.bf16.mxu0 0
    %283 = vmatpush1.bf16.msra.mxu0 0
    %284 = vmatprep.subr.bf16.mxu0 0
    %285 = vmatpush1.bf16.msra.mxu0 0
    %286 = vmatprep.subr.bf16.mxu0 0
    %287 = vmatpush1.bf16.msra.mxu0 0
    %288 = vmatprep.subr.bf16.mxu0 0
    %289 = vmatpush1.bf16.msra.mxu0 0
    %290 = vmatprep.subr.bf16.mxu0 0
    %291 = vmatpush1.bf16.msra.mxu0 0
    %292 = vmatprep.subr.bf16.mxu0 0
    %293 = vmatpush1.bf16.msra.mxu0 0
    %294 = vmatprep.subr.bf16.mxu0 0
    %295 = vmatpush1.bf16.msra.mxu0 0
    %296 = vmatprep.subr.bf16.mxu0 0
    %297 = vmatpush1.bf16.msra.mxu0 0
    %298 = vmatprep.mubr.bf16.mxu0 0
    %299 = vmatmul.mubr.bf16.gmra.mrb[0].mxu0 %v264
    %v300 = vpop.f32.mrb[0].mxu0
    %v301 = vadd.f32 %v237, %v300
    %v302 = vpop.f32.mrb[0].mxu0
    %v303 = vpop.f32.mrb[0].mxu0
    %v304 = vpop.f32.mrb[0].mxu0
    %305 = vdwg.mxu0
    %v306 = vlaneseq
    %v307 = vand.u32 %v306, 127
    %vm308 = vcmp.ge.s32.totalorder %v307, 48
    %vm309 = vcmp.lt.s32.totalorder %v307, 56
    %vm310 = vmand %vm308, %vm309
    %v311 = vsel %vm310, 1, 0
    %vm312 = vcmp.eq.s32.totalorder %v311, 1
    %313 = vset.pattern.permute.xlu0 15
    %314 = vperm.xlu0 %313, %v66
    %v315 = vpop.permute.xlu0 %314
    %v317 = vsel %vm312, %v315, 0.0
    %v318 = vadd.f32 %v301, %v317
    %319 = vst.msk [vmem:[%s7] sm:$0xff] %vm178, %v318
    // Predicated region
    $region42: #{nbeats_forward.1} parent=1 // pred_check
      _
    $region43: #{nbeats_forward.1} parent=1 // pred_check_branch
      %321 = sbr.rel (0) target = $region45
    $region44: #{nbeats_forward.1} parent=1 // pred_region
      _
    $region45: #{nbeats_forward.1} parent=1 // pred_fallthru
      _
    // Predicated region
    $region46: #{nbeats_forward.1} parent=1 // pred_check
      _
    $region47: #{nbeats_forward.1} parent=1 // pred_check_branch
      %323 = sbr.rel (0) target = $region49
    $region48: #{nbeats_forward.1} parent=1 // pred_region
      _
    $region49: #{nbeats_forward.1} parent=1 // pred_fallthru
      _
    %324 = vsyncpa [#allocation3], 1
    %325 = vsyncpa [#allocation5], 1

</llo_original>
